<compile_context>
chip_gen: v7x
topology: tpu7x:2x2x1
jax: 0.10.0
libtpu: 0.0.40
codegen_flags: <defaults>
</compile_context>

<pallas_src>
import functools
import math

import jax
import jax.numpy as jnp
from jax.experimental import pallas as pl
from jax.experimental.pallas import tpu as pltpu


# ----------------------------------------------------------------------------
# Pallas kernel: per-point GMM score_samples + class log-prob + log(ppp_rate)
# ----------------------------------------------------------------------------
def _gmm_ppp_kernel(x_ref, cls_ref, wT_ref, b_ref, c_ref, o_ref, *, K, D):
    """Points-on-lanes GMM log-density + class log-prob.

    x_ref   : (D, TN)   features, transposed (points on lane axis)
    cls_ref : (1, TN)   per-point class log-prob (pre-gathered in wrapper)
    wT_ref  : (K*D, D)  stacked precision-cholesky factors, transposed
    b_ref   : (K*D, 1)  mu_k @ prec_chol_k, stacked as a column
    c_ref   : (K,)      SMEM scalars: log w_k + log|P_k| - D/2 log(2pi)
                        + log(ppp_rate) [+ -log(img_area)]
    o_ref   : (1, TN)   lane-dense output row
    """
    x = x_ref[...]                                                     # (D, TN)
    # y[k*D + e, n] = ((x_n - mu_k) @ prec_chol_k)[e]
    y = jnp.dot(wT_ref[...], x, preferred_element_type=jnp.float32) - b_ref[...]
    yy = y * y                                                         # (K*D, TN)

    # Per-component squared Mahalanobis distance: sum D rows per component
    # (VPU/XLU sublane sum; no second matmul).
    lp = []
    for k in range(K):
        sq_k = jnp.sum(yy[k * D:(k + 1) * D, :], axis=0, keepdims=True)  # (1, TN)
        lp.append(c_ref[k] - 0.5 * sq_k)                                 # (1, TN)

    # logsumexp over mixture components (K lane-dense rows).
    m = lp[0]
    for r in lp[1:]:
        m = jnp.maximum(m, r)
    acc = jnp.exp(lp[0] - m)
    for r in lp[1:]:
        acc = acc + jnp.exp(r - m)
    lse = m + jnp.log(acc)                                             # (1, TN)

    o_ref[...] = lse + cls_ref[...]


# ----------------------------------------------------------------------------
# Plain-JAX glue: parameter scaling / precision cholesky (sklearn semantics)
# ----------------------------------------------------------------------------
def _precisions_cholesky(covs):
    """sklearn _compute_precision_cholesky for 'full' covariance."""
    chol = jnp.linalg.cholesky(covs)                                   # lower, (K,D,D)
    d = covs.shape[-1]
    eye = jnp.broadcast_to(jnp.eye(d, dtype=covs.dtype), covs.shape)
    sol = jax.lax.linalg.triangular_solve(chol, eye, left_side=True, lower=True)
    return jnp.swapaxes(sol, -1, -2)                                   # (K,D,D)


def _fold_params(scale_vec, means, covariances, weights, ppp_rate, extra):
    """Fold scaled GMM parameters into kernel-friendly matrices."""
    means_s = means * scale_vec[None, :]
    covs_s = covariances * scale_vec[None, :, None] * scale_vec[None, None, :]
    prec_chol = _precisions_cholesky(covs_s)                           # (K, D, D)
    log_det = jnp.sum(jnp.log(jnp.diagonal(prec_chol, axis1=-2, axis2=-1)), axis=-1)
    K, D, _ = prec_chol.shape
    # WT[k*D + e, d] = prec_chol[k, d, e]  so  WT @ x^T = (x @ P_k)^T stacked
    WT = jnp.transpose(prec_chol, (0, 2, 1)).reshape(K * D, D)
    b = jnp.einsum("kd,kde->ke", means_s, prec_chol).reshape(K * D, 1)
    c = (jnp.log(weights) + log_det - 0.5 * D * math.log(2.0 * math.pi)
         + jnp.log(ppp_rate) + extra)                                  # (K,)
    return (WT.astype(jnp.float32), b.astype(jnp.float32),
            c.astype(jnp.float32), K, D)


def poisson_point_process_gmm_forward(
        src, image_size, *, means, covariances, weights, class_dist_log,
        ppp_rate, uniform_center_pos=False, tile_n=256, min_kernel_n=256):
    """Forward pass of PoissonPointProcessGMM (integrate=False, one image)."""
    src = src.astype(jnp.float32)
    image_size = image_size.astype(jnp.float32)
    img_size = jnp.tile(image_size[::-1], 2)                           # (w,h,w,h)

    boxes = src[:, :-1]                                                # (N, 4)
    cls_idx = src[:, -1].astype(jnp.int32)                             # (N,)
    # Class log-prob gather handled in XLA (trivial), streamed lane-dense.
    cls_lp = class_dist_log.astype(jnp.float32)[cls_idx]               # (N,)

    if uniform_center_pos:
        # GMM over box sizes (w, h); uniform over center positions.
        feats = jnp.stack([boxes[:, 2] - boxes[:, 0],
                           boxes[:, 3] - boxes[:, 1]], axis=1)         # (N, 2)
        scale_vec = img_size[:2]
        extra = -jnp.log(img_size[0] * img_size[1])                    # -log(img_area)
    else:
        feats = boxes                                                  # (N, 4)
        scale_vec = img_size
        extra = jnp.float32(0.0)

    WT, b, c, K, D = _fold_params(scale_vec, means, covariances, weights,
                                  ppp_rate, extra)
    N = feats.shape[0]

    # Tiny-N fallback: kernel launch + tile padding would dominate; fused XLA
    # is already optimal here.
    if N < min_kernel_n:
        y = jnp.dot(feats, WT.T) - b[:, 0][None, :]                    # (N, K*D)
        sq = jnp.sum((y * y).reshape(N, K, D), axis=-1)                # (N, K)
        lse = jax.scipy.special.logsumexp(c[None, :] - 0.5 * sq, axis=-1)
        return lse + cls_lp

    # Lane-dense tiling: tile_n multiple of 128; pad N up to a tile multiple.
    tile_n = max(128, (int(tile_n) // 128) * 128)
    n_pad = tile_n * (-(-N // tile_n))
    pad = n_pad - N
    feats_t = jnp.pad(feats.astype(jnp.float32).T, ((0, 0), (0, pad)))  # (D, n_pad)
    cls_row = jnp.pad(cls_lp[None, :], ((0, 0), (0, pad)))              # (1, n_pad)

    kernel = functools.partial(_gmm_ppp_kernel, K=K, D=D)
    out = pl.pallas_call(
        kernel,
        out_shape=jax.ShapeDtypeStruct((1, n_pad), jnp.float32),
        grid=(n_pad // tile_n,),
        in_specs=[
            pl.BlockSpec((D, tile_n), lambda i: (0, i)),       # feats^T tile
            pl.BlockSpec((1, tile_n), lambda i: (0, i)),       # class log-prob tile
            pl.BlockSpec((K * D, D), lambda i: (0, 0)),        # W^T (broadcast)
            pl.BlockSpec((K * D, 1), lambda i: (0, 0)),        # b column
            pl.BlockSpec(memory_space=pltpu.MemorySpace.SMEM),  # c scalars
        ],
        out_specs=pl.BlockSpec((1, tile_n), lambda i: (0, i)),
        compiler_params=pltpu.CompilerParams(
            dimension_semantics=("parallel",)),
    )(feats_t, cls_row, WT, b, c)

    return out[0, :N]                                                  # (N,)


# ----------------------------------------------------------------------------
# Pure-JAX reference (mirrors sklearn score_samples + module forward)
# ----------------------------------------------------------------------------
def _reference_forward(src, image_size, *, means, covariances, weights,
                       class_dist_log, ppp_rate, uniform_center_pos=False):
    img_size = jnp.tile(image_size[::-1].astype(jnp.float32), 2)
    boxes = src[:, :-1]
    cls_idx = src[:, -1].astype(jnp.int32)
    if uniform_center_pos:
        feats = jnp.stack([boxes[:, 2] - boxes[:, 0],
                           boxes[:, 3] - boxes[:, 1]], axis=1)
        scale_vec = img_size[:2]
        extra = -jnp.log(img_size[0] * img_size[1])
    else:
        feats = boxes
        scale_vec = img_size
        extra = 0.0
    means_s = means * scale_vec[None, :]
    covs_s = covariances * scale_vec[None, :, None] * scale_vec[None, None, :]
    prec_chol = _precisions_cholesky(covs_s)
    log_det = jnp.sum(jnp.log(jnp.diagonal(prec_chol, axis1=-2, axis2=-1)), axis=-1)
    D = feats.shape[-1]
    y = (jnp.einsum("nd,kde->nke", feats, prec_chol)
         - jnp.einsum("kd,kde->ke", means_s, prec_chol)[None])
    sq = jnp.sum(y * y, axis=-1)                                       # (N, K)
    log_gauss = -0.5 * (D * math.log(2.0 * math.pi) + sq) + log_det[None, :]
    box_lp = jax.scipy.special.logsumexp(log_gauss + jnp.log(weights)[None, :], axis=-1)
    box_lp = box_lp + extra
    cls_lp = class_dist_log[cls_idx]
    return cls_lp + box_lp + jnp.log(ppp_rate)


# ----------------------------------------------------------------------------
if __name__ == "__main__":
    key = jax.random.PRNGKey(0)
    (k1, k2, k3, k4, k5, k6, k7, k8, k9, k10) = jax.random.split(key, 10)

    # detections, box dims, GMM components, classes
    N, D, K, C = 1024, 4, 3, 8

    # GMM over full boxes (normalized-coordinate space) — uniform_center_pos=False path.
    means4 = jax.random.uniform(k1, (K, D), minval=0.2, maxval=0.8, dtype=jnp.float32)
    A4 = jax.random.normal(k2, (K, D, D), dtype=jnp.float32) * 0.05
    covs4 = A4 @ jnp.swapaxes(A4, -1, -2) + 0.02 * jnp.eye(D, dtype=jnp.float32)

    # GMM over (w, h) only — uniform_center_pos=True path.
    means2 = jax.random.uniform(k9, (K, 2), minval=0.1, maxval=0.5, dtype=jnp.float32)
    A2 = jax.random.normal(k10, (K, 2, 2), dtype=jnp.float32) * 0.05
    covs2 = A2 @ jnp.swapaxes(A2, -1, -2) + 0.02 * jnp.eye(2, dtype=jnp.float32)

    weights = jax.nn.softmax(jax.random.normal(k3, (K,), dtype=jnp.float32))
    class_dist_log = jax.nn.log_softmax(jax.random.normal(k4, (C,), dtype=jnp.float32))
    ppp_rate = jnp.float32(3.0)

    # Synthetic detections: [x0, y0, x1, y1, class_id] in pixel coordinates.
    image_size = jnp.array([32.0, 48.0], dtype=jnp.float32)            # (H, W)
    x0 = jax.random.uniform(k5, (N,), minval=0.0, maxval=30.0)
    y0 = jax.random.uniform(k6, (N,), minval=0.0, maxval=20.0)
    wh = jax.random.uniform(k7, (N, 2), minval=2.0, maxval=12.0)
    cls = jax.random.randint(k8, (N,), 0, C).astype(jnp.float32)
    src = jnp.stack([x0, y0, x0 + wh[:, 0], y0 + wh[:, 1], cls], axis=1)  # (N, 5)

    cases = [
        (False, means4, covs4),   # GMM over full boxes
        (True, means2, covs2),    # GMM over box sizes, uniform centers
    ]
    for ucp, mu, cov in cases:
        out = poisson_point_process_gmm_forward(
            src, image_size,
            means=mu, covariances=cov, weights=weights,
            class_dist_log=class_dist_log, ppp_rate=ppp_rate,
            uniform_center_pos=ucp, tile_n=256)
        out = jax.block_until_ready(out)

        ref = _reference_forward(
            src, image_size,
            means=mu, covariances=cov, weights=weights,
            class_dist_log=class_dist_log, ppp_rate=ppp_rate,
            uniform_center_pos=ucp)
        ref = jax.block_until_ready(ref)

        assert out.shape == (N,)
        assert jnp.all(jnp.isfinite(out)), out
        assert jnp.allclose(out, ref, atol=1e-3, rtol=1e-3), (
            ucp, jnp.max(jnp.abs(out - ref)))

    # TODO(synk): integrate=True branch just returns ppp_rate (scalar); no kernel needed.
    print("KERNEL_OK")
</pallas_src>

<mosaic_0001>
module attributes {stable_mosaic.version = 11 : i64} {
  func.func @_gmm_ppp_kernel(%arg0: i32, %arg1: memref<4x256xf32, #tpu.memory_space<vmem>>, %arg2: memref<1x256xf32, #tpu.memory_space<vmem>>, %arg3: memref<12x4xf32, #tpu.memory_space<vmem>>, %arg4: memref<12x1xf32, #tpu.memory_space<vmem>>, %arg5: memref<3xf32, #tpu.memory_space<smem>>, %arg6: memref<1x256xf32, #tpu.memory_space<vmem>>) attributes {dimension_semantics = [#tpu.dimension_semantics<parallel>], iteration_bounds = array<i64: 4>, scalar_prefetch = 0 : i64, scratch_operands = 0 : i64, tpu.core_type = #tpu.core_type<tc>, window_params = [{transform_indices = @transform_0, window_bounds = array<i64: 4, 256>}, {transform_indices = @transform_1, window_bounds = array<i64: 1, 256>}, {pipeline_mode = #tpu.pipeline_mode<synchronous>, transform_indices = @transform_2, window_bounds = array<i64: 12, 4>}, {pipeline_mode = #tpu.pipeline_mode<synchronous>, transform_indices = @transform_3, window_bounds = array<i64: 12, 1>}, {transform_indices = @transform_4, window_bounds = array<i64: 3>}, {transform_indices = @transform_5, window_bounds = array<i64: 1, 256>}]} {
    %c0 = arith.constant 0 : index
    %c0_0 = arith.constant 0 : index
    %0 = vector.load %arg1[%c0, %c0_0] : memref<4x256xf32, #tpu.memory_space<vmem>>, vector<4x256xf32>
    %c0_1 = arith.constant 0 : index
    %c0_2 = arith.constant 0 : index
    %1 = vector.load %arg3[%c0_1, %c0_2] : memref<12x4xf32, #tpu.memory_space<vmem>>, vector<12x4xf32>
    %cst = arith.constant dense<0.000000e+00> : vector<12x256xf32>
    %2 = tpu.matmul %1, %0, %cst {dimension_numbers = #tpu.dot_dimension_numbers<[1], [0], [0], [1], [0, 0, 1, 1], [], []>} : vector<12x4xf32>, vector<4x256xf32>, vector<12x256xf32> -> vector<12x256xf32>
    %c0_3 = arith.constant 0 : index
    %c0_4 = arith.constant 0 : index
    %3 = vector.load %arg4[%c0_3, %c0_4] : memref<12x1xf32, #tpu.memory_space<vmem>>, vector<12x1xf32>
    %4 = vector.broadcast %3 : vector<12x1xf32> to vector<12x256xf32>
    %5 = arith.subf %2, %4 : vector<12x256xf32>
    %6 = arith.mulf %5, %5 : vector<12x256xf32>
    %7 = vector.extract_strided_slice %6 {offsets = [0, 0], sizes = [4, 256], strides = [1, 1]} : vector<12x256xf32> to vector<4x256xf32>
    %cst_5 = arith.constant dense<0.000000e+00> : vector<256xf32>
    %8 = vector.multi_reduction <add>, %7, %cst_5 [0] : vector<4x256xf32> to vector<256xf32>
    %9 = vector.shape_cast %8 : vector<256xf32> to vector<1x256xf32>
    %c0_6 = arith.constant 0 : index
    %10 = memref.load %arg5[%c0_6] : memref<3xf32, #tpu.memory_space<smem>>
    %cst_7 = arith.constant 5.000000e-01 : f32
    %11 = vector.broadcast %cst_7 : f32 to vector<1x256xf32>
    %12 = arith.mulf %11, %9 : vector<1x256xf32>
    %13 = vector.broadcast %10 : f32 to vector<1x256xf32>
    %14 = arith.subf %13, %12 : vector<1x256xf32>
    %15 = vector.extract_strided_slice %6 {offsets = [4, 0], sizes = [4, 256], strides = [1, 1]} : vector<12x256xf32> to vector<4x256xf32>
    %cst_8 = arith.constant dense<0.000000e+00> : vector<256xf32>
    %16 = vector.multi_reduction <add>, %15, %cst_8 [0] : vector<4x256xf32> to vector<256xf32>
    %17 = vector.shape_cast %16 : vector<256xf32> to vector<1x256xf32>
    %c1 = arith.constant 1 : index
    %18 = memref.load %arg5[%c1] : memref<3xf32, #tpu.memory_space<smem>>
    %cst_9 = arith.constant 5.000000e-01 : f32
    %19 = vector.broadcast %cst_9 : f32 to vector<1x256xf32>
    %20 = arith.mulf %19, %17 : vector<1x256xf32>
    %21 = vector.broadcast %18 : f32 to vector<1x256xf32>
    %22 = arith.subf %21, %20 : vector<1x256xf32>
    %23 = vector.extract_strided_slice %6 {offsets = [8, 0], sizes = [4, 256], strides = [1, 1]} : vector<12x256xf32> to vector<4x256xf32>
    %cst_10 = arith.constant dense<0.000000e+00> : vector<256xf32>
    %24 = vector.multi_reduction <add>, %23, %cst_10 [0] : vector<4x256xf32> to vector<256xf32>
    %25 = vector.shape_cast %24 : vector<256xf32> to vector<1x256xf32>
    %c2 = arith.constant 2 : index
    %26 = memref.load %arg5[%c2] : memref<3xf32, #tpu.memory_space<smem>>
    %cst_11 = arith.constant 5.000000e-01 : f32
    %27 = vector.broadcast %cst_11 : f32 to vector<1x256xf32>
    %28 = arith.mulf %27, %25 : vector<1x256xf32>
    %29 = vector.broadcast %26 : f32 to vector<1x256xf32>
    %30 = arith.subf %29, %28 : vector<1x256xf32>
    %31 = arith.maximumf %14, %22 : vector<1x256xf32>
    %32 = arith.maximumf %31, %30 : vector<1x256xf32>
    %33 = arith.subf %14, %32 : vector<1x256xf32>
    %34 = math.exp %33 : vector<1x256xf32>
    %35 = arith.subf %22, %32 : vector<1x256xf32>
    %36 = math.exp %35 : vector<1x256xf32>
    %37 = arith.addf %34, %36 : vector<1x256xf32>
    %38 = arith.subf %30, %32 : vector<1x256xf32>
    %39 = math.exp %38 : vector<1x256xf32>
    %40 = arith.addf %37, %39 : vector<1x256xf32>
    %41 = math.log %40 : vector<1x256xf32>
    %42 = arith.addf %32, %41 : vector<1x256xf32>
    %c0_12 = arith.constant 0 : index
    %c0_13 = arith.constant 0 : index
    %43 = vector.load %arg2[%c0_12, %c0_13] : memref<1x256xf32, #tpu.memory_space<vmem>>, vector<1x256xf32>
    %44 = arith.addf %42, %43 : vector<1x256xf32>
    %c0_14 = arith.constant 0 : index
    %c0_15 = arith.constant 0 : index
    %45 = vector.load %arg6[%c0_14, %c0_15] : memref<1x256xf32, #tpu.memory_space<vmem>>, vector<1x256xf32>
    tpu.vector_store %arg6[%c0_14, %c0_15], %44 {strides = array<i32>} : memref<1x256xf32, #tpu.memory_space<vmem>>, vector<1x256xf32>,
    return
  }
  func.func @transform_0(%arg0: i32) -> (i32, i32) {
    %c0_i32 = arith.constant 0 : i32
    %c0_i32_0 = arith.constant 0 : i32
    return %c0_i32, %arg0 : i32, i32
  }
  func.func @transform_1(%arg0: i32) -> (i32, i32) {
    %c0_i32 = arith.constant 0 : i32
    %c0_i32_0 = arith.constant 0 : i32
    return %c0_i32, %arg0 : i32, i32
  }
  func.func @transform_2(%arg0: i32) -> (i32, i32) {
    %c0_i32 = arith.constant 0 : i32
    %c0_i32_0 = arith.constant 0 : i32
    %c0_i32_1 = arith.constant 0 : i32
    return %c0_i32, %c0_i32_0 : i32, i32
  }
  func.func @transform_3(%arg0: i32) -> (i32, i32) {
    %c0_i32 = arith.constant 0 : i32
    %c0_i32_0 = arith.constant 0 : i32
    %c0_i32_1 = arith.constant 0 : i32
    return %c0_i32, %c0_i32_0 : i32, i32
  }
  func.func @transform_4(%arg0: i32) -> i32 {
    %c0_i32 = arith.constant 0 : i32
    %c0_i32_0 = arith.constant 0 : i32
    return %c0_i32 : i32
  }
  func.func @transform_5(%arg0: i32) -> (i32, i32) {
    %c0_i32 = arith.constant 0 : i32
    %c0_i32_0 = arith.constant 0 : i32
    return %c0_i32, %arg0 : i32, i32
  }
}

</mosaic_0001>

<llo_original>
// kernel: tpu_custom_call.1
$region0: #{tpu_custom_call.1}
  #allocation0 [shape = 'u32[]', space=smem, size = 0x4, offset = 0x4, fixed_abs, tag = 'smem constant byte address 0x4 - core index']
  #allocation1 [shape = 'u32[144,128]{1,0:T(1,128)}', space=vmem, size = 0x12000, scoped, tag = 'internal scratch']
  %s0 = inlined_call_operand.vmem [shape: f32[4,1024], index: 0, kind: input, shape index: {}]
  %s1 = inlined_call_operand.vmem [shape: f32[1,1024], index: 1, kind: input, shape index: {}]
  %s2 = inlined_call_operand.vmem [shape: f32[12,4], index: 2, kind: input, shape index: {}]
  %s3 = inlined_call_operand.vmem [shape: f32[12,1], index: 3, kind: input, shape index: {}]
  %s4 = inlined_call_operand.vmem [shape: f32[3], index: 4, kind: input, shape index: {}]
  %s5 = inlined_call_operand.hbm [shape: f32[1,1024], index: 5, kind: output, shape index: {}]
  %s6 = sld [smem:[#allocation0]]
  $region57: #{tpu_custom_call.1} parent=0
    _
  %s8 = ssub.s32 1, %s6
  %s9 = scalar_select 0, %s8, %s6
  $region1: #{tpu_custom_call.1} parent=0
    #allocation2 [shape = 'u8[512]{0}', space=smem, size = 0x200, scoped, tag = 'input window, operand 4, single buffered']
    #allocation3 [shape = 's32[2]{0}', space=sflag, size = 0x8, scoped, tag = 'scoped memory for tpu_custom_call.1']
    #allocation4 [shape = 's32[2]{0}', space=sflag, size = 0x8, scoped, tag = 'scoped memory for tpu_custom_call.1']
    #allocation5 [shape = 'u8[2048]{0}', space=vmem, size = 0x800, scoped, tag = 'output window, operand 0']
    %10 = vsyncpa [#allocation4], 0
    %11 = vsyncpa [#allocation3], 0
    %s12 = scalar_lea.sflag [#allocation3], 1
    %13 = vsyncpa %s12, 0
    loop: start=0, step=1, limit=6
    $region2: #{tpu_custom_call.1} parent=1 // loop_pre_header
      _
    $region3: #{tpu_custom_call.1} parent=1 // loop_header
      %s15 = sphi 0, %s19
      %p16 = scmp.ge.s32.totalorder %s15, 6
      %s25 = sphi 0, %s27
      %s28 = sphi 0, %s25
      %s29 = sphi 0, %s28
      %s45 = sphi 0, %s29
      %s51 = sphi 0, %s53
      %s54 = sphi 0, %s51
      %s55 = sphi 0, %s54
      %s71 = sphi 0, %s55
      %s75 = sphi 0, %s75
      %s77 = sphi 0, %s75
      %s78 = sphi 0, %s77
      %s92 = sphi 0, %s78
      %s96 = sphi 0, %s96
      %s98 = sphi 0, %s96
      %s99 = sphi 0, %s98
      %s113 = sphi 0, %s99
      %s117 = sphi 0, %s117
      %s119 = sphi 0, %s117
      %s120 = sphi 0, %s119
      %s134 = sphi 0, %s120
      %s140 = sphi 0, %s142
      %s143 = sphi 0, %s140
      %s144 = sphi 0, %s143
      %s160 = sphi 0, %s144
    $region4: #{tpu_custom_call.1} parent=1 // loop_header_branch
      %18 = sbr.rel (%p16) target = $region8
    $region5: #{tpu_custom_call.1} parent=1 // loop_body
      %s20 = ssub.s32 %s15, 1
      %s21 = ssub.s32 %s15, 2
      %s22 = sadd.s32 %s15, 1
      %s23 = ssub.s32 %s15, %s22
      %p24 = scmp.eq.s32.totalorder %s23, 0
      %s26 = sadd.s32 %s25, 1
      %s27 = scalar_select %p24, %s25, %s26
      %p30 = pneg %p24
      %p31 = scmp.eq.s32.totalorder %s15, 3
      %p32 = por %p30, %p31
      %p33 = scmp.ne.s32.totalorder %s25, %s28
      %p34 = scmp.eq.s32.totalorder %s15, 0
      %p35 = por %p33, %p34
      %p36 = scmp.ne.s32.totalorder %s25, %s28
      %p37 = scmp.eq.s32.totalorder %s20, 3
      %p38 = por %p36, %p37
      %p39 = scmp.ne.s32.totalorder %s28, %s29
      %p40 = scmp.eq.s32.totalorder %s20, 0
      %p41 = por %p39, %p40
      %p42 = scmp.ne.s32.totalorder %s28, %s29
      %p43 = scmp.eq.s32.totalorder %s21, 3
      %p44 = por %p42, %p43
      %p46 = scmp.ne.s32.totalorder %s29, %s45
      %p47 = scmp.eq.s32.totalorder %s21, 0
      %p48 = por %p46, %p47
      %s49 = ssub.s32 %s15, %s22
      %p50 = scmp.eq.s32.totalorder %s49, 0
      %s52 = sadd.s32 %s51, 1
      %s53 = scalar_select %p50, %s51, %s52
      %p56 = pneg %p50
      %p57 = scmp.eq.s32.totalorder %s15, 3
      %p58 = por %p56, %p57
      %p59 = scmp.ne.s32.totalorder %s51, %s54
      %p60 = scmp.eq.s32.totalorder %s15, 0
      %p61 = por %p59, %p60
      %p62 = scmp.ne.s32.totalorder %s51, %s54
      %p63 = scmp.eq.s32.totalorder %s20, 3
      %p64 = por %p62, %p63
      %p65 = scmp.ne.s32.totalorder %s54, %s55
      %p66 = scmp.eq.s32.totalorder %s20, 0
      %p67 = por %p65, %p66
      %p68 = scmp.ne.s32.totalorder %s54, %s55
      %p69 = scmp.eq.s32.totalorder %s21, 3
      %p70 = por %p68, %p69
      %p72 = scmp.ne.s32.totalorder %s55, %s71
      %p73 = scmp.eq.s32.totalorder %s21, 0
      %p74 = por %p72, %p73
      %s76 = sadd.s32 %s75, 1
      %p79 = scmp.eq.s32.totalorder %s15, 3
      %p80 = scmp.ne.s32.totalorder %s75, %s77
      %p81 = scmp.eq.s32.totalorder %s15, 0
      %p82 = por %p80, %p81
      %p83 = scmp.ne.s32.totalorder %s75, %s77
      %p84 = scmp.eq.s32.totalorder %s20, 3
      %p85 = por %p83, %p84
      %p86 = scmp.ne.s32.totalorder %s77, %s78
      %p87 = scmp.eq.s32.totalorder %s20, 0
      %p88 = por %p86, %p87
      %p89 = scmp.ne.s32.totalorder %s77, %s78
      %p90 = scmp.eq.s32.totalorder %s21, 3
      %p91 = por %p89, %p90
      %p93 = scmp.ne.s32.totalorder %s78, %s92
      %p94 = scmp.eq.s32.totalorder %s21, 0
      %p95 = por %p93, %p94
      %s97 = sadd.s32 %s96, 1
      %p100 = scmp.eq.s32.totalorder %s15, 3
      %p101 = scmp.ne.s32.totalorder %s96, %s98
      %p102 = scmp.eq.s32.totalorder %s15, 0
      %p103 = por %p101, %p102
      %p104 = scmp.ne.s32.totalorder %s96, %s98
      %p105 = scmp.eq.s32.totalorder %s20, 3
      %p106 = por %p104, %p105
      %p107 = scmp.ne.s32.totalorder %s98, %s99
      %p108 = scmp.eq.s32.totalorder %s20, 0
      %p109 = por %p107, %p108
      %p110 = scmp.ne.s32.totalorder %s98, %s99
      %p111 = scmp.eq.s32.totalorder %s21, 3
      %p112 = por %p110, %p111
      %p114 = scmp.ne.s32.totalorder %s99, %s113
      %p115 = scmp.eq.s32.totalorder %s21, 0
      %p116 = por %p114, %p115
      %s118 = sadd.s32 %s117, 1
      %p121 = scmp.eq.s32.totalorder %s15, 3
      %p122 = scmp.ne.s32.totalorder %s117, %s119
      %p123 = scmp.eq.s32.totalorder %s15, 0
      %p124 = por %p122, %p123
      %p125 = scmp.ne.s32.totalorder %s117, %s119
      %p126 = scmp.eq.s32.totalorder %s20, 3
      %p127 = por %p125, %p126
      %p128 = scmp.ne.s32.totalorder %s119, %s120
      %p129 = scmp.eq.s32.totalorder %s20, 0
      %p130 = por %p128, %p129
      %p131 = scmp.ne.s32.totalorder %s119, %s120
      %p132 = scmp.eq.s32.totalorder %s21, 3
      %p133 = por %p131, %p132
      %p135 = scmp.ne.s32.totalorder %s120, %s134
      %p136 = scmp.eq.s32.totalorder %s21, 0
      %p137 = por %p135, %p136
      %s138 = ssub.s32 %s15, %s22
      %p139 = scmp.eq.s32.totalorder %s138, 0
      %s141 = sadd.s32 %s140, 1
      %s142 = scalar_select %p139, %s140, %s141
      %p145 = pneg %p139
      %p146 = scmp.eq.s32.totalorder %s15, 3
      %p147 = por %p145, %p146
      %p148 = scmp.ne.s32.totalorder %s140, %s143
      %p149 = scmp.eq.s32.totalorder %s15, 0
      %p150 = por %p148, %p149
      %p151 = scmp.ne.s32.totalorder %s140, %s143
      %p152 = scmp.eq.s32.totalorder %s20, 3
      %p153 = por %p151, %p152
      %p154 = scmp.ne.s32.totalorder %s143, %s144
      %p155 = scmp.eq.s32.totalorder %s20, 0
      %p156 = por %p154, %p155
      %p157 = scmp.ne.s32.totalorder %s143, %s144
      %p158 = scmp.eq.s32.totalorder %s21, 3
      %p159 = por %p157, %p158
      %p161 = scmp.ne.s32.totalorder %s144, %s160
      %p162 = scmp.eq.s32.totalorder %s21, 0
      %p163 = por %p161, %p162
      %p164 = scmp.le.s32.totalorder 1, %s15
      %p165 = scmp.lt.s32.totalorder %s15, 5
      %p166 = pnand %p164, %p165
      %p167 = pneg %p166
      // Predicated region
      $region9: #{tpu_custom_call.1} parent=5 // pred_check
        _
      $region10: #{tpu_custom_call.1} parent=5 // pred_check_branch
        %169 = sbr.rel (%p166) target = $region12
      $region11: #{tpu_custom_call.1} parent=5 // pred_region
        %s170 = ssub.s32 %s15, 1
        // Predicated region
        $region13: #{tpu_custom_call.1} parent=11 // pred_check
          %p171 = pneg %p88
        $region14: #{tpu_custom_call.1} parent=11 // pred_check_branch
          %173 = sbr.rel (%p171) target = $region16
        $region15: #{tpu_custom_call.1} parent=11 // pred_region
          _
        $region16: #{tpu_custom_call.1} parent=11 // pred_fallthru
          _
        // Predicated region
        $region17: #{tpu_custom_call.1} parent=11 // pred_check
          %p174 = pneg %p109
        $region18: #{tpu_custom_call.1} parent=11 // pred_check_branch
          %176 = sbr.rel (%p174) target = $region20
        $region19: #{tpu_custom_call.1} parent=11 // pred_region
          _
        $region20: #{tpu_custom_call.1} parent=11 // pred_fallthru
          _
        // Predicated region
        $region21: #{tpu_custom_call.1} parent=11 // pred_check
          %p177 = pneg %p130
        $region22: #{tpu_custom_call.1} parent=11 // pred_check_branch
          %179 = sbr.rel (%p177) target = $region24
        $region23: #{tpu_custom_call.1} parent=11 // pred_region
          %s181 = ssub.s32 16, 16
          %182 = vsyncadd [#allocation4], %s181
          %s184 = sshll.u32 %s4, 4
          %s185 = int_to_ptr.vmem [resolvable:$true] %s184
          %187 = dma.vmem_to_smem %s185, 16, [#allocation2], [#allocation4]
        $region24: #{tpu_custom_call.1} parent=11 // pred_fallthru
          _
      $region12: #{tpu_custom_call.1} parent=5 // pred_fallthru
        _
      %p188 = scmp.lt.s32.totalorder %s15, 4
      // Predicated region
      $region25: #{tpu_custom_call.1} parent=5 // pred_check
        %p189 = pneg %p188
      $region26: #{tpu_custom_call.1} parent=5 // pred_check_branch
        %191 = sbr.rel (%p189) target = $region28
      $region27: #{tpu_custom_call.1} parent=5 // pred_region
        // Predicated region
        $region29: #{tpu_custom_call.1} parent=27 // pred_check
          %p192 = pneg %p35
        $region30: #{tpu_custom_call.1} parent=27 // pred_check_branch
          %194 = sbr.rel (%p192) target = $region32
        $region31: #{tpu_custom_call.1} parent=27 // pred_region
          %s195 = smul.u32 2, %s15
          %p196 = scmp.lt.s32.totalorder %s195, 7
          %s197 = scalar_select %p196, %s195, 7
          %s198 = smul.addr %s197, 4
          %s199 = scalar_lea.vmem %s0, %s198
          %s200 = smul.u32 2, %s15
        $region32: #{tpu_custom_call.1} parent=27 // pred_fallthru
          _
        // Predicated region
        $region33: #{tpu_custom_call.1} parent=27 // pred_check
          %p201 = pneg %p61
        $region34: #{tpu_custom_call.1} parent=27 // pred_check_branch
          %203 = sbr.rel (%p201) target = $region36
        $region35: #{tpu_custom_call.1} parent=27 // pred_region
          %s204 = smul.u32 2, %s15
          %p205 = scmp.lt.s32.totalorder %s204, 7
          %s206 = scalar_select %p205, %s204, 7
          %s207 = scalar_lea.vmem %s1, %s206
          %s208 = smul.u32 2, %s15
        $region36: #{tpu_custom_call.1} parent=27 // pred_fallthru
          _
      $region28: #{tpu_custom_call.1} parent=5 // pred_fallthru
        _
      %p209 = scmp.le.s32.totalorder 1, %s15
      %p210 = scmp.lt.s32.totalorder %s15, 5
      %p211 = pnand %p209, %p210
      %p212 = pneg %p211
      // Predicated region
      $region37: #{tpu_custom_call.1} parent=5 // pred_check
        _
      $region38: #{tpu_custom_call.1} parent=5 // pred_check_branch
        %214 = sbr.rel (%p211) target = $region40
      $region39: #{tpu_custom_call.1} parent=5 // pred_region
        %s215 = ssub.s32 %s15, 1
        // Predicated region
        $region41: #{tpu_custom_call.1} parent=39 // pred_check
          %p216 = pneg %p130
        $region42: #{tpu_custom_call.1} parent=39 // pred_check_branch
          %218 = sbr.rel (%p216) target = $region44
        $region43: #{tpu_custom_call.1} parent=39 // pred_region
          %219 = dma.done [#allocation4], 16
        $region44: #{tpu_custom_call.1} parent=39 // pred_fallthru
          _
        %220 = sfence
        %s221 = smul.u32 2, %s20
        %p222 = scmp.lt.s32.totalorder %s221, 7
        %s223 = scalar_select %p222, %s221, 7
        %s224 = smul.addr %s223, 4
        %s225 = scalar_lea.vmem %s0, %s224
        %p226 = pneg %p41
        %p227 = pneg %p38
        %s228 = smul.u32 2, %s20
        %p229 = scmp.lt.s32.totalorder %s228, 7
        %s230 = scalar_select %p229, %s228, 7
        %s231 = scalar_lea.vmem %s1, %s230
        %p232 = pneg %p67
        %p233 = pneg %p64
        %p234 = pneg %p88
        %p235 = pneg %p85
        %p236 = pneg %p109
        %p237 = pneg %p106
        %p238 = pneg %p130
        %p239 = pneg %p127
        %p240 = pneg %p156
        %p241 = pneg %p153
        %s242 = sand.u32 %s143, 1
        %s243 = scalar_lea.sflag [#allocation3], %s242
        %s244 = sand.u32 %s143, 1
        %s245 = smul.addr %s244, 2
        %s246 = scalar_lea.vmem [#allocation5], %s245
        %s247 = smul.u32 2, %s20
        %p248 = scmp.lt.s32.totalorder %s247, 7
        %s249 = scalar_select %p248, %s247, 7
        %s250 = smul.addr %s249, 4
        %s251 = scalar_lea.vmem %s0, %s250
        %s252 = smul.u32 2, %s20
        %s253 = smul.u32 2, %s20
        %p254 = scmp.lt.s32.totalorder %s253, 7
        %s255 = scalar_select %p254, %s253, 7
        %s256 = scalar_lea.vmem %s1, %s255
        %s257 = smul.u32 2, %s20
        %s258 = smul.u32 2, %s20
        %v259 = vld [vmem:[%s251] sm:$0xff]
        %v260 = vld [vmem:[%s2] sm:$0xff]
        %v261 = vld [vmem:[%s2 + $0x8] sm:$0xf]
        %v263 = vcombine.high %v259, %v259
        %vm264 = vcmask 31744
        %v266 = vsel %vm264, %v260, 0
        %v269 = vsel %vm264, %v261, 0
        %vm271 = vcmask 1043456
        %v272 = vsel %vm271, %v259, 0
        %v274 = vsel %vm271, %v263, 0
        %276 = vmatprep.subr.mxu0 %v274
        %277 = vmatpush1.msra.mxu0 %v272
        %278 = vmatprep.subr.mxu0 0.0
        %279 = vmatpush1.msra.mxu0 0.0
        %280 = vmatprep.subr.mxu0 0.0
        %281 = vmatpush1.msra.mxu0 0.0
        %282 = vmatprep.subr.mxu0 0.0
        %283 = vmatpush1.msra.mxu0 0.0
        %284 = vmatprep.subr.mxu0 0.0
        %285 = vmatpush1.msra.mxu0 0.0
        %286 = vmatprep.subr.mxu0 0.0
        %287 = vmatpush1.msra.mxu0 0.0
        %288 = vmatprep.subr.mxu0 0.0
        %289 = vmatpush1.msra.mxu0 0.0
        %290 = vmatprep.subr.mxu0 0.0
        %291 = vmatpush1.msra.mxu0 0.0
        %292 = vmatprep.subr.mxu0 0.0
        %293 = vmatpush1.msra.mxu0 0.0
        %294 = vmatprep.subr.mxu0 0.0
        %295 = vmatpush1.msra.mxu0 0.0
        %296 = vmatprep.subr.mxu0 0.0
        %297 = vmatpush1.msra.mxu0 0.0
        %298 = vmatprep.subr.mxu0 0.0
        %299 = vmatpush1.msra.mxu0 0.0
        %300 = vmatprep.subr.mxu0 0.0
        %301 = vmatpush1.msra.mxu0 0.0
        %302 = vmatprep.subr.mxu0 0.0
        %303 = vmatpush1.msra.mxu0 0.0
        %304 = vmatprep.subr.mxu0 0.0
        %305 = vmatpush1.msra.mxu0 0.0
        %306 = vmatprep.subr.mxu0 0.0
        %307 = vmatpush1.msra.mxu0 0.0
        %308 = vmatprep.subr.mxu0 0.0
        %309 = vmatpush1.msra.mxu0 0.0
        %310 = vmatprep.subr.mxu0 0.0
        %311 = vmatpush1.msra.mxu0 0.0
        %312 = vmatprep.subr.mxu0 0.0
        %313 = vmatpush1.msra.mxu0 0.0
        %314 = vmatprep.subr.mxu0 0.0
        %315 = vmatpush1.msra.mxu0 0.0
        %316 = vmatprep.subr.mxu0 0.0
        %317 = vmatpush1.msra.mxu0 0.0
        %318 = vmatprep.subr.mxu0 0.0
        %319 = vmatpush1.msra.mxu0 0.0
        %320 = vmatprep.subr.mxu0 0.0
        %321 = vmatpush1.msra.mxu0 0.0
        %322 = vmatprep.subr.mxu0 0.0
        %323 = vmatpush1.msra.mxu0 0.0
        %324 = vmatprep.subr.mxu0 0.0
        %325 = vmatpush1.msra.mxu0 0.0
        %326 = vmatprep.subr.mxu0 0.0
        %327 = vmatpush1.msra.mxu0 0.0
        %328 = vmatprep.subr.mxu0 0.0
        %329 = vmatpush1.msra.mxu0 0.0
        %330 = vmatprep.subr.mxu0 0.0
        %331 = vmatpush1.msra.mxu0 0.0
        %332 = vmatprep.subr.mxu0 0.0
        %333 = vmatpush1.msra.mxu0 0.0
        %334 = vmatprep.subr.mxu0 0.0
        %335 = vmatpush1.msra.mxu0 0.0
        %336 = vmatprep.subr.mxu0 0.0
        %337 = vmatpush1.msra.mxu0 0.0
        %338 = vmatprep.subr.mxu0 0.0
        %339 = vmatpush1.msra.mxu0 0.0
        %340 = vmatprep.mubr.f32.mxu0 0.0
        %341 = vmatmul.mubr.f32.gmra.mrb[0].mxu0 %v266
        %v342 = vpop.f32.mrb[0].mxu0
        %v343 = vadd.f32 0.0, %v342
        %v344 = vpop.f32.mrb[0].mxu0
        %v345 = vadd.f32 0.0, %v344
        %346 = vmatprep.mubr.f32.mxu0 0.0
        %347 = vmatmul.mubr.f32.gmra.mrb[0].mxu0 %v269
        %v348 = vpop.f32.mrb[0].mxu0
        %v349 = vadd.f32 0.0, %v348
        %v350 = vpop.f32.mrb[0].mxu0
        %v351 = vadd.f32 0.0, %v350
        %352 = vdwg.mxu0
        %v353 = vld [vmem:[%s3] sm:$0xff]
        %v354 = vld [vmem:[%s3 + $0x8] sm:$0xf]
        %356 = vset.pattern.permute.xlu0 0
        %357 = vperm.xlu0 %356, %v353
        %v358 = vpop.permute.xlu0 %357
        %361 = vset.pattern.permute.xlu0 0
        %362 = vperm.xlu0 %361, %v354
        %v363 = vpop.permute.xlu0 %362
        %v365 = vsub.f32 %v343, %v358
        %v366 = vsub.f32 %v345, %v358
        %v367 = vsub.f32 %v349, %v363
        %v368 = vsub.f32 %v351, %v363
        %v369 = vmul.f32 %v365, %v365
        %v370 = vmul.f32 %v366, %v366
        %v371 = vmul.f32 %v367, %v367
        %v372 = vmul.f32 %v368, %v368
        %v373 = vsel %vm271, %v369, 0.0
        %v374 = vrot.slane %v373, 4
        %v375 = vadd.f32 %v373, %v374
        %v376 = vrot.slane %v375, 2
        %v377 = vadd.f32 %v375, %v376
        %v378 = vrot.slane %v377, 1
        %v379 = vadd.f32 %v377, %v378
        %v380 = vsel %vm271, %v370, 0.0
        %v381 = vrot.slane %v380, 4
        %v382 = vadd.f32 %v380, %v381
        %v383 = vrot.slane %v382, 2
        %v384 = vadd.f32 %v382, %v383
        %v385 = vrot.slane %v384, 1
        %v386 = vadd.f32 %v384, %v385
        %s387 = sld [smem:[#allocation2]]
        %v388 = vmul.f32 %v379, 0.5
        %v389 = vmul.f32 %v386, 0.5
        %v390 = vstv %s387
        %v391 = vsub.f32 %v390, %v388
        %v392 = vsub.f32 %v390, %v389
        %v395 = vrot.slane %v369, 4
        %v396 = vrot.slane %v370, 4
        %v399 = vsel %vm271, %v395, 0.0
        %v400 = vrot.slane %v399, 4
        %v401 = vadd.f32 %v399, %v400
        %v402 = vrot.slane %v401, 2
        %v403 = vadd.f32 %v401, %v402
        %v404 = vrot.slane %v403, 1
        %v405 = vadd.f32 %v403, %v404
        %v406 = vsel %vm271, %v396, 0.0
        %v407 = vrot.slane %v406, 4
        %v408 = vadd.f32 %v406, %v407
        %v409 = vrot.slane %v408, 2
        %v410 = vadd.f32 %v408, %v409
        %v411 = vrot.slane %v410, 1
        %v412 = vadd.f32 %v410, %v411
        %s413 = sld [smem:[#allocation2 + $0x1]]
        %v414 = vmul.f32 %v405, 0.5
        %v415 = vmul.f32 %v412, 0.5
        %v416 = vstv %s413
        %v417 = vsub.f32 %v416, %v414
        %v418 = vsub.f32 %v416, %v415
        %v419 = vsel %vm271, %v371, 0.0
        %v420 = vrot.slane %v419, 4
        %v421 = vadd.f32 %v419, %v420
        %v422 = vrot.slane %v421, 2
        %v423 = vadd.f32 %v421, %v422
        %v424 = vrot.slane %v423, 1
        %v425 = vadd.f32 %v423, %v424
        %v426 = vsel %vm271, %v372, 0.0
        %v427 = vrot.slane %v426, 4
        %v428 = vadd.f32 %v426, %v427
        %v429 = vrot.slane %v428, 2
        %v430 = vadd.f32 %v428, %v429
        %v431 = vrot.slane %v430, 1
        %v432 = vadd.f32 %v430, %v431
        %s433 = sld [smem:[#allocation2 + $0x2]]
        %v434 = vmul.f32 %v425, 0.5
        %v435 = vmul.f32 %v432, 0.5
        %v436 = vstv %s433
        %v437 = vsub.f32 %v436, %v434
        %v438 = vsub.f32 %v436, %v435
        %v439 = vmax.f32 %v391, %v417
        %v440 = vmax.f32 %v392, %v418
        %v441 = vmax.f32 %v439, %v437
        %v442 = vmax.f32 %v440, %v438
        %v443 = vsub.f32 %v391, %v441
        %v444 = vsub.f32 %v392, %v442
        %v445 = vmul.f32 %v443, 1.442695
        %v446 = vpow.pop %v445
        %v447 = vmul.f32 %v444, 1.442695
        %v448 = vpow.pop %v447
        %v449 = vsub.f32 %v417, %v441
        %v450 = vsub.f32 %v418, %v442
        %v451 = vmul.f32 %v449, 1.442695
        %v452 = vpow.pop %v451
        %v453 = vmul.f32 %v450, 1.442695
        %v454 = vpow.pop %v453
        %v455 = vadd.f32 %v446, %v452
        %v456 = vadd.f32 %v448, %v454
        %v457 = vsub.f32 %v437, %v441
        %v458 = vsub.f32 %v438, %v442
        %v459 = vmul.f32 %v457, 1.442695
        %v460 = vpow.pop %v459
        %v461 = vmul.f32 %v458, 1.442695
        %v462 = vpow.pop %v461
        %v463 = vadd.f32 %v455, %v460
        %v464 = vadd.f32 %v456, %v462
        %v465 = vlog2.pop %v463
        %v466 = vmul.f32 %v465, 0.6931472
        %v467 = vlog2.pop %v464
        %v468 = vmul.f32 %v467, 0.6931472
        %v469 = vadd.f32 %v441, %v466
        %v470 = vadd.f32 %v442, %v468
        %v471 = vld [vmem:[%s256] sm:$0x3]
        %v473 = vlaneseq
        %v474 = vshrl.u32 %v473, 7
        %v475 = vsub.s32 0, %v474
        %v476 = vrot.slane %v471, %v475
        %v477 = vlaneseq
        %v478 = vshrl.u32 %v477, 7
        %v479 = vsub.s32 1, %v478
        %v480 = vrot.slane %v471, %v479
        %v483 = vadd.f32 %v469, %v476
        %v484 = vadd.f32 %v470, %v480
        %v487 = vcombine.low %v483, %v484
        %v489 = vunpack.c.l.s4 1966171168
        %v490 = vunpack.c.0.s8 %v489
        %v491 = vlaneseq
        %v492 = vshrl.u32 %v491, 7
        %v493 = vsub.s32 %v490, %v492
        %v494 = vrot.slane %v487, %v493
        %v496 = vunpack.c.l.s4 1966171168
        %v497 = vunpack.c.0.s8 %v496
        %v498 = vlaneseq
        %v499 = vshrl.u32 %v498, 7
        %v500 = vsub.s32 %v497, %v499
        %v501 = vrot.slane %v494, %v500
        %v503 = vlaneseq
        %vm504 = vcmp.ge.s32.totalorder %v503, 0
        %vm505 = vcmp.lt.s32.totalorder %v503, 256
        %vm506 = vmand %vm504, %vm505
        %507 = vst.msk [vmem:[%s246] sm:$0x3] %vm506, %v501
        %s508 = sand.u32 %s143, 1
        %s509 = scalar_lea.sflag [#allocation3], %s508
        %s510 = sand.u32 %s143, 1
        %s511 = smul.addr %s510, 2
        %s512 = scalar_lea.vmem [#allocation5], %s511
        // Predicated region
        $region45: #{tpu_custom_call.1} parent=39 // pred_check
          %p513 = pneg %p153
        $region46: #{tpu_custom_call.1} parent=39 // pred_check_branch
          %515 = sbr.rel (%p513) target = $region48
        $region47: #{tpu_custom_call.1} parent=39 // pred_region
          %s516 = smul.u32 2, %s20
          %s518 = ssub.s32 32, 32
          %519 = vsyncadd %s509, %s518
          %s520 = smul.addr %s516, 16
          %s521 = scalar_lea.hbm %s5, %s520
          %s523 = sshll.u32 %s512, 4
          %s524 = int_to_ptr.vmem [resolvable:$true] %s523
          %526 = dma.vmem_to_hbm [thread:$0]  %s524, 32, %s521, %s509
        $region48: #{tpu_custom_call.1} parent=39 // pred_fallthru
          _
      $region40: #{tpu_custom_call.1} parent=5 // pred_fallthru
        _
      %p527 = scmp.le.s32.totalorder 2, %s15
      // Predicated region
      $region49: #{tpu_custom_call.1} parent=5 // pred_check
        %p528 = pneg %p527
      $region50: #{tpu_custom_call.1} parent=5 // pred_check_branch
        %530 = sbr.rel (%p528) target = $region52
      $region51: #{tpu_custom_call.1} parent=5 // pred_region
        %s531 = ssub.s32 %s15, 2
        // Predicated region
        $region53: #{tpu_custom_call.1} parent=51 // pred_check
          %p532 = pneg %p159
        $region54: #{tpu_custom_call.1} parent=51 // pred_check_branch
          %534 = sbr.rel (%p532) target = $region56
        $region55: #{tpu_custom_call.1} parent=51 // pred_region
          %s535 = sand.u32 %s144, 1
          %s536 = scalar_lea.sflag [#allocation3], %s535
          %s537 = sand.u32 %s144, 1
          %s538 = smul.addr %s537, 2
          %s539 = scalar_lea.vmem [#allocation5], %s538
          %540 = dma.done %s536, 32
        $region56: #{tpu_custom_call.1} parent=51 // pred_fallthru
          _
      $region52: #{tpu_custom_call.1} parent=5 // pred_fallthru
        _
    $region6: #{tpu_custom_call.1} parent=1 // loop_footer
      %s19 = sadd.s32 1, %s15
    $region7: #{tpu_custom_call.1} parent=1 // loop_footer_branch
      %14 = sbr.rel target = $region3
    $region8: #{tpu_custom_call.1} parent=1 // loop_exit
      _
    %541 = vsyncpa [#allocation3], 1
    %s542 = scalar_lea.sflag [#allocation3], 1
    %543 = vsyncpa %s542, 1
    %544 = vsyncpa [#allocation4], 1
    %s545 = scalar_lea.sflag [#allocation4], 1
    %546 = vsyncpa %s545, 1

</llo_original>
